<compile_context>
chip_gen: v7x
topology: tpu7x:2x2x1
jax: 0.10.0
libtpu: 0.0.40
codegen_flags: <defaults>
</compile_context>

<pallas_src>
import functools

import jax
import jax.numpy as jnp
from jax.experimental import pallas as pl
from jax.experimental.pallas import tpu as pltpu

_LANE = 128          # vreg lane width (last dim)
_SUBLANE_BF16 = 16   # bf16 packs 16 rows per sublane-vreg -> pad batch to 16
_TILE_M = 128        # M tile used once the batch is large enough for a grid


def _round_up(n, m):
    return ((n + m - 1) // m) * m


def _mlp_kernel(num_layers, *refs):
    """Fused MLP.  refs = (x, w0, b0, w1, b1, ..., w{L-1}, b{L-1}, out).

    Weights are bf16 (MXU-native); accumulation / bias-add / ReLU stay f32.
    """
    x_ref = refs[0]
    o_ref = refs[-1]
    wb = refs[1:-1]

    acc = x_ref[...].astype(jnp.float32)              # (TM, in_pad) f32
    for i in range(num_layers):                       # static unroll
        w = wb[2 * i][...]                            # (in_pad_i, out_pad_i) bf16
        b = wb[2 * i + 1][...]                        # (1, out_pad_i) f32
        acc = jnp.dot(acc.astype(jnp.bfloat16), w,
                      preferred_element_type=jnp.float32) + b
        if i < num_layers - 1:
            acc = jnp.maximum(acc, 0.0)
    o_ref[...] = acc.astype(o_ref.dtype)              # single lane-dense store


def prepare_mlp_params(params):
    """ONE-TIME prep: zero-pad feature dims to 128 lanes, cast weights to bf16.

    Returns a flat tuple (w0, b0, w1, b1, ...) of padded arrays.  Call this at
    init and reuse the result for every forward (hoists all per-call padding).
    """
    flat = []
    for w, b in params:
        n, k = w.shape
        n_p = _round_up(n, _LANE)
        k_p = _round_up(k, _LANE)
        w_p = jnp.pad(w, ((0, n_p - n), (0, k_p - k))).astype(jnp.bfloat16)
        b_p = jnp.pad(b, ((0, 0), (0, k_p - b.shape[-1]))).astype(jnp.float32)
        flat.append(w_p)
        flat.append(b_p)
    return tuple(flat)


@functools.partial(jax.jit, static_argnames=("output_dim",))
def mlp_forward(x, flat_params, output_dim):
    """x: (B, input_dim) f32; flat_params: output of prepare_mlp_params.

    Returns (B, output_dim), matching the PyTorch MLP forward.
    """
    flat = list(flat_params)
    num_layers = len(flat) // 2
    batch, in_dim = x.shape
    in_pad = flat[0].shape[0]
    out_pad = flat[-1].shape[-1]

    b_pad = _round_up(batch, _SUBLANE_BF16)
    use_grid = b_pad > _TILE_M
    if use_grid:
        b_pad = _round_up(batch, _TILE_M)

    # Pad x only when actually needed (shapes are static at trace time).
    if (b_pad, in_pad) != (batch, in_dim):
        x = jnp.pad(x, ((0, b_pad - batch), (0, in_pad - in_dim)))

    # Advisory cost estimate (helps XLA schedule around the custom call).
    flops = 0
    bytes_accessed = x.size * x.dtype.itemsize + b_pad * out_pad * 4
    for i in range(num_layers):
        wn, wk = flat[2 * i].shape
        flops += 2 * b_pad * wn * wk
        bytes_accessed += flat[2 * i].size * 2 + flat[2 * i + 1].size * 4
    cost = pl.CostEstimate(flops=flops, transcendentals=0,
                           bytes_accessed=bytes_accessed)

    kernel = functools.partial(_mlp_kernel, num_layers)

    if not use_grid:
        # Small batch: one whole-array, grid-less call (launch-latency regime).
        vmem = pl.BlockSpec(memory_space=pltpu.MemorySpace.VMEM)
        out_padded = pl.pallas_call(
            kernel,
            out_shape=jax.ShapeDtypeStruct((b_pad, out_pad), x.dtype),
            in_specs=[vmem] * (1 + 2 * num_layers),
            out_specs=vmem,
            cost_estimate=cost,
        )(x, *flat)
    else:
        # Large batch: shard M across a "parallel" grid so v7x's two
        # TensorCores (and megacore generally) both get work.  Weights/bias
        # are full-array blocks, re-used at every grid step.
        in_specs = [pl.BlockSpec((_TILE_M, in_pad), lambda i: (i, 0))]
        for l in range(num_layers):
            wn, wk = flat[2 * l].shape
            in_specs.append(pl.BlockSpec((wn, wk), lambda i: (0, 0)))
            in_specs.append(pl.BlockSpec((1, wk), lambda i: (0, 0)))
        out_specs = pl.BlockSpec((_TILE_M, out_pad), lambda i: (i, 0))
        out_padded = pl.pallas_call(
            kernel,
            out_shape=jax.ShapeDtypeStruct((b_pad, out_pad), x.dtype),
            grid=(b_pad // _TILE_M,),
            in_specs=in_specs,
            out_specs=out_specs,
            compiler_params=pltpu.CompilerParams(
                dimension_semantics=("parallel",)),
            cost_estimate=cost,
        )(x, *flat)

    # TODO(synk): if the downstream consumer can take the (b_pad, 128) slab
    # directly, drop this slice (one fewer XLA op in a latency-bound regime).
    return out_padded[:batch, :output_dim]


def init_mlp_params(key, input_dim, hidden_dim, output_dim, num_layers):
    """Deterministic init matching nn.Linear shapes (weights stored transposed)."""
    h = [hidden_dim] * (num_layers - 1)
    dims_in = [input_dim] + h
    dims_out = h + [output_dim]
    params = []
    for n, k in zip(dims_in, dims_out):
        key, wk, bk = jax.random.split(key, 3)
        bound = 1.0 / (n ** 0.5)  # torch.nn.Linear default scheme
        w = jax.random.uniform(wk, (n, k), jnp.float32, -bound, bound)
        b = jax.random.uniform(bk, (1, k), jnp.float32, -bound, bound)
        params.append((w, b))
    return params


def _reference_bf16(x, params, num_layers):
    """JAX reference with the same bf16-operand / f32-accum matmul semantics."""
    y = x
    for i, (w, b) in enumerate(params):
        y = jnp.dot(y.astype(jnp.bfloat16), w.astype(jnp.bfloat16),
                    preferred_element_type=jnp.float32) + b
        if i < num_layers - 1:
            y = jnp.maximum(y, 0.0)
    return y


if __name__ == "__main__":
    key = jax.random.PRNGKey(0)

    batch = 8
    input_dim = 32
    hidden_dim = 64
    output_dim = 16
    num_layers = 3

    key, xk = jax.random.split(key)
    x = jax.random.normal(xk, (batch, input_dim), jnp.float32)

    params = init_mlp_params(key, input_dim, hidden_dim, output_dim, num_layers)
    flat = prepare_mlp_params(params)          # one-time padded + bf16 pytree

    out = mlp_forward(x, flat, output_dim)
    out = jax.block_until_ready(out)
    assert out.shape == (batch, output_dim)

    # 1) Tight check vs. a JAX reference with identical bf16-matmul semantics.
    ref_bf16 = _reference_bf16(x, params, num_layers)
    assert jnp.allclose(out, ref_bf16, atol=1e-4, rtol=1e-4), \
        float(jnp.max(jnp.abs(out - ref_bf16)))

    # 2) Loose check vs. the exact f32 PyTorch math (bf16 operand rounding).
    ref_f32 = x
    for i, (w, b) in enumerate(params):
        ref_f32 = ref_f32 @ w + b
        if i < num_layers - 1:
            ref_f32 = jnp.maximum(ref_f32, 0.0)
    assert jnp.allclose(out, ref_f32, atol=5e-2, rtol=5e-2)

    # Also exercise the large-batch grid path (M sharded across TensorCores).
    big_batch = 256
    key, xk2 = jax.random.split(key)
    xb = jax.random.normal(xk2, (big_batch, input_dim), jnp.float32)
    outb = jax.block_until_ready(mlp_forward(xb, flat, output_dim))
    refb = _reference_bf16(xb, params, num_layers)
    assert outb.shape == (big_batch, output_dim)
    assert jnp.allclose(outb, refb, atol=1e-4, rtol=1e-4)

    print("KERNEL_OK")
</pallas_src>

<mosaic_0001>
module attributes {stable_mosaic.version = 11 : i64} {
  func.func @_mlp_kernel(%arg0: memref<16x128xf32, #tpu.memory_space<vmem>>, %arg1: memref<128x128xbf16, #tpu.memory_space<vmem>>, %arg2: memref<1x128xf32, #tpu.memory_space<vmem>>, %arg3: memref<128x128xbf16, #tpu.memory_space<vmem>>, %arg4: memref<1x128xf32, #tpu.memory_space<vmem>>, %arg5: memref<128x128xbf16, #tpu.memory_space<vmem>>, %arg6: memref<1x128xf32, #tpu.memory_space<vmem>>, %arg7: memref<16x128xf32, #tpu.memory_space<vmem>>) attributes {dimension_semantics = [], scalar_prefetch = 0 : i64, scratch_operands = 0 : i64, tpu.core_type = #tpu.core_type<tc>} {
    %c0 = arith.constant 0 : index
    %c0_0 = arith.constant 0 : index
    %0 = vector.load %arg0[%c0, %c0_0] : memref<16x128xf32, #tpu.memory_space<vmem>>, vector<16x128xf32>
    %c0_1 = arith.constant 0 : index
    %c0_2 = arith.constant 0 : index
    %1 = vector.load %arg1[%c0_1, %c0_2] : memref<128x128xbf16, #tpu.memory_space<vmem>>, vector<128x128xbf16>
    %c0_3 = arith.constant 0 : index
    %c0_4 = arith.constant 0 : index
    %2 = vector.load %arg2[%c0_3, %c0_4] : memref<1x128xf32, #tpu.memory_space<vmem>>, vector<1x128xf32>
    %3 = arith.truncf %0 : vector<16x128xf32> to vector<16x128xbf16>
    %cst = arith.constant dense<0.000000e+00> : vector<16x128xf32>
    %4 = tpu.matmul %3, %1, %cst {dimension_numbers = #tpu.dot_dimension_numbers<[1], [0], [0], [1], [0, 0, 1, 1], [], []>} : vector<16x128xbf16>, vector<128x128xbf16>, vector<16x128xf32> -> vector<16x128xf32>
    %5 = vector.broadcast %2 : vector<1x128xf32> to vector<16x128xf32>
    %6 = arith.addf %4, %5 : vector<16x128xf32>
    %cst_5 = arith.constant 0.000000e+00 : f32
    %7 = vector.broadcast %cst_5 : f32 to vector<16x128xf32>
    %8 = arith.maximumf %6, %7 : vector<16x128xf32>
    %c0_6 = arith.constant 0 : index
    %c0_7 = arith.constant 0 : index
    %9 = vector.load %arg3[%c0_6, %c0_7] : memref<128x128xbf16, #tpu.memory_space<vmem>>, vector<128x128xbf16>
    %c0_8 = arith.constant 0 : index
    %c0_9 = arith.constant 0 : index
    %10 = vector.load %arg4[%c0_8, %c0_9] : memref<1x128xf32, #tpu.memory_space<vmem>>, vector<1x128xf32>
    %11 = arith.truncf %8 : vector<16x128xf32> to vector<16x128xbf16>
    %cst_10 = arith.constant dense<0.000000e+00> : vector<16x128xf32>
    %12 = tpu.matmul %11, %9, %cst_10 {dimension_numbers = #tpu.dot_dimension_numbers<[1], [0], [0], [1], [0, 0, 1, 1], [], []>} : vector<16x128xbf16>, vector<128x128xbf16>, vector<16x128xf32> -> vector<16x128xf32>
    %13 = vector.broadcast %10 : vector<1x128xf32> to vector<16x128xf32>
    %14 = arith.addf %12, %13 : vector<16x128xf32>
    %cst_11 = arith.constant 0.000000e+00 : f32
    %15 = vector.broadcast %cst_11 : f32 to vector<16x128xf32>
    %16 = arith.maximumf %14, %15 : vector<16x128xf32>
    %c0_12 = arith.constant 0 : index
    %c0_13 = arith.constant 0 : index
    %17 = vector.load %arg5[%c0_12, %c0_13] : memref<128x128xbf16, #tpu.memory_space<vmem>>, vector<128x128xbf16>
    %c0_14 = arith.constant 0 : index
    %c0_15 = arith.constant 0 : index
    %18 = vector.load %arg6[%c0_14, %c0_15] : memref<1x128xf32, #tpu.memory_space<vmem>>, vector<1x128xf32>
    %19 = arith.truncf %16 : vector<16x128xf32> to vector<16x128xbf16>
    %cst_16 = arith.constant dense<0.000000e+00> : vector<16x128xf32>
    %20 = tpu.matmul %19, %17, %cst_16 {dimension_numbers = #tpu.dot_dimension_numbers<[1], [0], [0], [1], [0, 0, 1, 1], [], []>} : vector<16x128xbf16>, vector<128x128xbf16>, vector<16x128xf32> -> vector<16x128xf32>
    %21 = vector.broadcast %18 : vector<1x128xf32> to vector<16x128xf32>
    %22 = arith.addf %20, %21 : vector<16x128xf32>
    %c0_17 = arith.constant 0 : index
    %c0_18 = arith.constant 0 : index
    %23 = vector.load %arg7[%c0_17, %c0_18] : memref<16x128xf32, #tpu.memory_space<vmem>>, vector<16x128xf32>
    tpu.vector_store %arg7[%c0_17, %c0_18], %22 {strides = array<i32>} : memref<16x128xf32, #tpu.memory_space<vmem>>, vector<16x128xf32>,
    return
  }
}

</mosaic_0001>

<llo_original>
// kernel: mlp_forward.1
$region0: #{mlp_forward.1}
  #allocation0 [shape = 'u32[]', space=smem, size = 0x4, offset = 0x4, fixed_abs, tag = 'smem constant byte address 0x4 - core index']
  #allocation1 [shape = 'u32[144,128]{1,0:T(1,128)}', space=vmem, size = 0x12000, scoped, tag = 'internal scratch']
  %s0 = inlined_call_operand.vmem [shape: f32[16,128], index: 0, kind: input, shape index: {}]
  %s1 = inlined_call_operand.hbm [shape: bf16[128,128], index: 1, kind: input, shape index: {}]
  %s2 = inlined_call_operand.vmem [shape: f32[1,128], index: 2, kind: input, shape index: {}]
  %s3 = inlined_call_operand.hbm [shape: bf16[128,128], index: 3, kind: input, shape index: {}]
  %s4 = inlined_call_operand.vmem [shape: f32[1,128], index: 4, kind: input, shape index: {}]
  %s5 = inlined_call_operand.hbm [shape: bf16[128,128], index: 5, kind: input, shape index: {}]
  %s6 = inlined_call_operand.vmem [shape: f32[1,128], index: 6, kind: input, shape index: {}]
  %s7 = inlined_call_operand.vmem [shape: f32[16,128], index: 7, kind: output, shape index: {}]
  %s8 = sld [smem:[#allocation0]]
  $region50: #{mlp_forward.1} parent=0
    _
  %s10 = ssub.s32 1, %s8
  %s11 = scalar_select 0, %s10, %s8
  $region1: #{mlp_forward.1} parent=0
    #allocation2 [shape = 'u8[32768]{0}', space=vmem, size = 0x8000, scoped, tag = 'input window, operand 1, single buffered']
    #allocation3 [shape = 's32[1]{0}', space=sflag, size = 0x4, scoped, tag = 'scoped memory for mlp_forward.1']
    #allocation4 [shape = 'u8[32768]{0}', space=vmem, size = 0x8000, scoped, tag = 'input window, operand 3, single buffered']
    #allocation5 [shape = 's32[1]{0}', space=sflag, size = 0x4, scoped, tag = 'scoped memory for mlp_forward.1']
    #allocation6 [shape = 'u8[32768]{0}', space=vmem, size = 0x8000, scoped, tag = 'input window, operand 5, single buffered']
    %12 = vsyncpa [#allocation3], 0
    %13 = vsyncpa [#allocation5], 0
    // Predicated region
    $region2: #{mlp_forward.1} parent=1 // pred_check
      _
    $region3: #{mlp_forward.1} parent=1 // pred_check_branch
      %15 = sbr.rel (0) target = $region5
    $region4: #{mlp_forward.1} parent=1 // pred_region
      _
    $region5: #{mlp_forward.1} parent=1 // pred_fallthru
      _
    // Predicated region
    $region6: #{mlp_forward.1} parent=1 // pred_check
      _
    $region7: #{mlp_forward.1} parent=1 // pred_check_branch
      %17 = sbr.rel (0) target = $region9
    $region8: #{mlp_forward.1} parent=1 // pred_region
      %s19 = ssub.s32 1024, 1024
      %20 = vsyncadd [#allocation3], %s19
      %s21 = sshll.u32 [#allocation2], 4
      %s22 = int_to_ptr.vmem [resolvable:$true] %s21
      %27 = dma.hbm_to_vmem [thread:$0]  %s1, 1024, %s22, [#allocation3], 64, 64, 4
    $region9: #{mlp_forward.1} parent=1 // pred_fallthru
      _
    // Predicated region
    $region10: #{mlp_forward.1} parent=1 // pred_check
      _
    $region11: #{mlp_forward.1} parent=1 // pred_check_branch
      %29 = sbr.rel (0) target = $region13
    $region12: #{mlp_forward.1} parent=1 // pred_region
      _
    $region13: #{mlp_forward.1} parent=1 // pred_fallthru
      _
    // Predicated region
    $region14: #{mlp_forward.1} parent=1 // pred_check
      _
    $region15: #{mlp_forward.1} parent=1 // pred_check_branch
      %31 = sbr.rel (0) target = $region17
    $region16: #{mlp_forward.1} parent=1 // pred_region
      %s33 = ssub.s32 1024, 1024
      %34 = vsyncadd [#allocation5], %s33
      %s35 = sshll.u32 [#allocation4], 4
      %s36 = int_to_ptr.vmem [resolvable:$true] %s35
      %41 = dma.hbm_to_vmem [thread:$0]  %s3, 1024, %s36, [#allocation5], 64, 64, 4
    $region17: #{mlp_forward.1} parent=1 // pred_fallthru
      _
    // Predicated region
    $region18: #{mlp_forward.1} parent=1 // pred_check
      _
    $region19: #{mlp_forward.1} parent=1 // pred_check_branch
      %43 = sbr.rel (0) target = $region21
    $region20: #{mlp_forward.1} parent=1 // pred_region
      _
    $region21: #{mlp_forward.1} parent=1 // pred_fallthru
      _
    // Predicated region
    $region22: #{mlp_forward.1} parent=1 // pred_check
      _
    $region23: #{mlp_forward.1} parent=1 // pred_check_branch
      %45 = sbr.rel (0) target = $region25
    $region24: #{mlp_forward.1} parent=1 // pred_region
      %s47 = ssub.s32 1024, 1024
      %48 = vsyncadd [#allocation5], %s47
      %s49 = sshll.u32 [#allocation6], 4
      %s50 = int_to_ptr.vmem [resolvable:$true] %s49
      %55 = dma.hbm_to_vmem [thread:$0]  %s5, 1024, %s50, [#allocation5], 64, 64, 4
    $region25: #{mlp_forward.1} parent=1 // pred_fallthru
      _
    // Predicated region
    $region26: #{mlp_forward.1} parent=1 // pred_check
      _
    $region27: #{mlp_forward.1} parent=1 // pred_check_branch
      %57 = sbr.rel (0) target = $region29
    $region28: #{mlp_forward.1} parent=1 // pred_region
      _
    $region29: #{mlp_forward.1} parent=1 // pred_fallthru
      _
    // Predicated region
    $region30: #{mlp_forward.1} parent=1 // pred_check
      _
    $region31: #{mlp_forward.1} parent=1 // pred_check_branch
      %59 = sbr.rel (0) target = $region33
    $region32: #{mlp_forward.1} parent=1 // pred_region
      %60 = dma.done [#allocation3], 1024
    $region33: #{mlp_forward.1} parent=1 // pred_fallthru
      _
    // Predicated region
    $region34: #{mlp_forward.1} parent=1 // pred_check
      _
    $region35: #{mlp_forward.1} parent=1 // pred_check_branch
      %62 = sbr.rel (0) target = $region37
    $region36: #{mlp_forward.1} parent=1 // pred_region
      %63 = dma.done [#allocation5], 1024
    $region37: #{mlp_forward.1} parent=1 // pred_fallthru
      _
    // Predicated region
    $region38: #{mlp_forward.1} parent=1 // pred_check
      _
    $region39: #{mlp_forward.1} parent=1 // pred_check_branch
      %65 = sbr.rel (0) target = $region41
    $region40: #{mlp_forward.1} parent=1 // pred_region
      %66 = dma.done [#allocation5], 1024
    $region41: #{mlp_forward.1} parent=1 // pred_fallthru
      _
    %v68 = vld [vmem:[%s0] sm:$0xff]
    %v69 = vld [vmem:[%s0 + $0x8] sm:$0xff]
    %v70 = vld [vmem:[#allocation2] sm:$0xf]
    %v71 = vld [vmem:[#allocation2 + $0x4] sm:$0xf]
    %v72 = vld [vmem:[#allocation2 + $0x8] sm:$0xf]
    %v73 = vld [vmem:[#allocation2 + $0xc] sm:$0xf]
    %v74 = vld [vmem:[#allocation2 + $0x10] sm:$0xf]
    %v75 = vld [vmem:[#allocation2 + $0x14] sm:$0xf]
    %v76 = vld [vmem:[#allocation2 + $0x18] sm:$0xf]
    %v77 = vld [vmem:[#allocation2 + $0x1c] sm:$0xf]
    %v78 = vld [vmem:[#allocation2 + $0x20] sm:$0xf]
    %v79 = vld [vmem:[#allocation2 + $0x24] sm:$0xf]
    %v80 = vld [vmem:[#allocation2 + $0x28] sm:$0xf]
    %v81 = vld [vmem:[#allocation2 + $0x2c] sm:$0xf]
    %v82 = vld [vmem:[#allocation2 + $0x30] sm:$0xf]
    %v83 = vld [vmem:[#allocation2 + $0x34] sm:$0xf]
    %v84 = vld [vmem:[#allocation2 + $0x38] sm:$0xf]
    %v85 = vld [vmem:[#allocation2 + $0x3c] sm:$0xf]
    %v86 = vld [vmem:[%s2] sm:$0x1]
    %v87 = vpack.c.bf16 %v69, %v68
    %v89 = vlaneseq
    %v90 = vshrl.u32 %v89, 7
    %v91 = vsub.s32 0, %v90
    %v92 = vrot.slane %v86, %v91
    %v110 = vunpack.c.l.b16 %v70
    %v111 = vunpack.c.l.b16 %v71
    %v112 = vunpack.c.l.b16 %v72
    %v113 = vunpack.c.l.b16 %v73
    %v114 = vunpack.c.l.b16 %v74
    %v115 = vunpack.c.l.b16 %v75
    %v116 = vunpack.c.l.b16 %v76
    %v117 = vunpack.c.l.b16 %v77
    %v118 = vunpack.c.l.b16 %v78
    %v119 = vunpack.c.l.b16 %v79
    %v120 = vunpack.c.l.b16 %v80
    %v121 = vunpack.c.l.b16 %v81
    %v122 = vunpack.c.l.b16 %v82
    %v123 = vunpack.c.l.b16 %v83
    %v124 = vunpack.c.l.b16 %v84
    %v125 = vunpack.c.l.b16 %v85
    %v126 = vpack.c.b16 %v111, %v110
    %v127 = vpack.c.b16 %v113, %v112
    %v128 = vpack.c.b16 %v115, %v114
    %v129 = vpack.c.b16 %v117, %v116
    %v130 = vpack.c.b16 %v119, %v118
    %v131 = vpack.c.b16 %v121, %v120
    %v132 = vpack.c.b16 %v123, %v122
    %v133 = vpack.c.b16 %v125, %v124
    %142 = vmatprep.subr.bf16.mxu0 0
    %143 = vmatpush1.bf16.msra.mxu0 %v126
    %144 = vmatprep.subr.bf16.mxu0 0
    %145 = vmatpush1.bf16.msra.mxu0 %v127
    %146 = vmatprep.subr.bf16.mxu0 0
    %147 = vmatpush1.bf16.msra.mxu0 %v128
    %148 = vmatprep.subr.bf16.mxu0 0
    %149 = vmatpush1.bf16.msra.mxu0 %v129
    %150 = vmatprep.subr.bf16.mxu0 0
    %151 = vmatpush1.bf16.msra.mxu0 %v130
    %152 = vmatprep.subr.bf16.mxu0 0
    %153 = vmatpush1.bf16.msra.mxu0 %v131
    %154 = vmatprep.subr.bf16.mxu0 0
    %155 = vmatpush1.bf16.msra.mxu0 %v132
    %156 = vmatprep.subr.bf16.mxu0 0
    %157 = vmatpush1.bf16.msra.mxu0 %v133
    %158 = vmatprep.subr.bf16.mxu0 0
    %159 = vmatpush1.bf16.msra.mxu0 0
    %160 = vmatprep.subr.bf16.mxu0 0
    %161 = vmatpush1.bf16.msra.mxu0 0
    %162 = vmatprep.subr.bf16.mxu0 0
    %163 = vmatpush1.bf16.msra.mxu0 0
    %164 = vmatprep.subr.bf16.mxu0 0
    %165 = vmatpush1.bf16.msra.mxu0 0
    %166 = vmatprep.subr.bf16.mxu0 0
    %167 = vmatpush1.bf16.msra.mxu0 0
    %168 = vmatprep.subr.bf16.mxu0 0
    %169 = vmatpush1.bf16.msra.mxu0 0
    %170 = vmatprep.subr.bf16.mxu0 0
    %171 = vmatpush1.bf16.msra.mxu0 0
    %172 = vmatprep.subr.bf16.mxu0 0
    %173 = vmatpush1.bf16.msra.mxu0 0
    %174 = vmatprep.mubr.bf16.mxu0 0
    %175 = vmatmul.mubr.bf16.gmra.mrb[0].mxu0 %v87
    %v176 = vpop.f32.mrb[0].mxu0
    %v177 = vadd.f32 %v92, %v176
    %v178 = vpop.f32.mrb[0].mxu0
    %v179 = vpop.f32.mrb[0].mxu0
    %v180 = vadd.f32 %v92, %v179
    %v181 = vpop.f32.mrb[0].mxu0
    %182 = vdwg.mxu0
    %v183 = vmax.f32 %v177, 0.0
    %v184 = vmax.f32 %v180, 0.0
    %v185 = vld [vmem:[#allocation4] sm:$0xf]
    %v186 = vld [vmem:[#allocation4 + $0x4] sm:$0xf]
    %v187 = vld [vmem:[#allocation4 + $0x8] sm:$0xf]
    %v188 = vld [vmem:[#allocation4 + $0xc] sm:$0xf]
    %v189 = vld [vmem:[#allocation4 + $0x10] sm:$0xf]
    %v190 = vld [vmem:[#allocation4 + $0x14] sm:$0xf]
    %v191 = vld [vmem:[#allocation4 + $0x18] sm:$0xf]
    %v192 = vld [vmem:[#allocation4 + $0x1c] sm:$0xf]
    %v193 = vld [vmem:[#allocation4 + $0x20] sm:$0xf]
    %v194 = vld [vmem:[#allocation4 + $0x24] sm:$0xf]
    %v195 = vld [vmem:[#allocation4 + $0x28] sm:$0xf]
    %v196 = vld [vmem:[#allocation4 + $0x2c] sm:$0xf]
    %v197 = vld [vmem:[#allocation4 + $0x30] sm:$0xf]
    %v198 = vld [vmem:[#allocation4 + $0x34] sm:$0xf]
    %v199 = vld [vmem:[#allocation4 + $0x38] sm:$0xf]
    %v200 = vld [vmem:[#allocation4 + $0x3c] sm:$0xf]
    %v201 = vld [vmem:[%s4] sm:$0x1]
    %v202 = vpack.c.bf16 %v184, %v183
    %v204 = vlaneseq
    %v205 = vshrl.u32 %v204, 7
    %v206 = vsub.s32 0, %v205
    %v207 = vrot.slane %v201, %v206
    %v225 = vunpack.c.l.b16 %v185
    %v226 = vunpack.c.l.b16 %v186
    %v227 = vunpack.c.l.b16 %v187
    %v228 = vunpack.c.l.b16 %v188
    %v229 = vunpack.c.l.b16 %v189
    %v230 = vunpack.c.l.b16 %v190
    %v231 = vunpack.c.l.b16 %v191
    %v232 = vunpack.c.l.b16 %v192
    %v233 = vunpack.c.l.b16 %v193
    %v234 = vunpack.c.l.b16 %v194
    %v235 = vunpack.c.l.b16 %v195
    %v236 = vunpack.c.l.b16 %v196
    %v237 = vunpack.c.l.b16 %v197
    %v238 = vunpack.c.l.b16 %v198
    %v239 = vunpack.c.l.b16 %v199
    %v240 = vunpack.c.l.b16 %v200
    %v241 = vpack.c.b16 %v226, %v225
    %v242 = vpack.c.b16 %v228, %v227
    %v243 = vpack.c.b16 %v230, %v229
    %v244 = vpack.c.b16 %v232, %v231
    %v245 = vpack.c.b16 %v234, %v233
    %v246 = vpack.c.b16 %v236, %v235
    %v247 = vpack.c.b16 %v238, %v237
    %v248 = vpack.c.b16 %v240, %v239
    %257 = vmatprep.subr.bf16.mxu0 0
    %258 = vmatpush1.bf16.msra.mxu0 %v241
    %259 = vmatprep.subr.bf16.mxu0 0
    %260 = vmatpush1.bf16.msra.mxu0 %v242
    %261 = vmatprep.subr.bf16.mxu0 0
    %262 = vmatpush1.bf16.msra.mxu0 %v243
    %263 = vmatprep.subr.bf16.mxu0 0
    %264 = vmatpush1.bf16.msra.mxu0 %v244
    %265 = vmatprep.subr.bf16.mxu0 0
    %266 = vmatpush1.bf16.msra.mxu0 %v245
    %267 = vmatprep.subr.bf16.mxu0 0
    %268 = vmatpush1.bf16.msra.mxu0 %v246
    %269 = vmatprep.subr.bf16.mxu0 0
    %270 = vmatpush1.bf16.msra.mxu0 %v247
    %271 = vmatprep.subr.bf16.mxu0 0
    %272 = vmatpush1.bf16.msra.mxu0 %v248
    %273 = vmatprep.subr.bf16.mxu0 0
    %274 = vmatpush1.bf16.msra.mxu0 0
    %275 = vmatprep.subr.bf16.mxu0 0
    %276 = vmatpush1.bf16.msra.mxu0 0
    %277 = vmatprep.subr.bf16.mxu0 0
    %278 = vmatpush1.bf16.msra.mxu0 0
    %279 = vmatprep.subr.bf16.mxu0 0
    %280 = vmatpush1.bf16.msra.mxu0 0
    %281 = vmatprep.subr.bf16.mxu0 0
    %282 = vmatpush1.bf16.msra.mxu0 0
    %283 = vmatprep.subr.bf16.mxu0 0
    %284 = vmatpush1.bf16.msra.mxu0 0
    %285 = vmatprep.subr.bf16.mxu0 0
    %286 = vmatpush1.bf16.msra.mxu0 0
    %287 = vmatprep.subr.bf16.mxu0 0
    %288 = vmatpush1.bf16.msra.mxu0 0
    %289 = vmatprep.mubr.bf16.mxu0 0
    %290 = vmatmul.mubr.bf16.gmra.mrb[0].mxu0 %v202
    %v291 = vpop.f32.mrb[0].mxu0
    %v292 = vadd.f32 %v207, %v291
    %v293 = vpop.f32.mrb[0].mxu0
    %v294 = vpop.f32.mrb[0].mxu0
    %v295 = vadd.f32 %v207, %v294
    %v296 = vpop.f32.mrb[0].mxu0
    %297 = vdwg.mxu0
    %v298 = vmax.f32 %v292, 0.0
    %v299 = vmax.f32 %v295, 0.0
    %v300 = vld [vmem:[#allocation6] sm:$0xf]
    %v301 = vld [vmem:[#allocation6 + $0x4] sm:$0xf]
    %v302 = vld [vmem:[#allocation6 + $0x8] sm:$0xf]
    %v303 = vld [vmem:[#allocation6 + $0xc] sm:$0xf]
    %v304 = vld [vmem:[#allocation6 + $0x10] sm:$0xf]
    %v305 = vld [vmem:[#allocation6 + $0x14] sm:$0xf]
    %v306 = vld [vmem:[#allocation6 + $0x18] sm:$0xf]
    %v307 = vld [vmem:[#allocation6 + $0x1c] sm:$0xf]
    %v308 = vld [vmem:[#allocation6 + $0x20] sm:$0xf]
    %v309 = vld [vmem:[#allocation6 + $0x24] sm:$0xf]
    %v310 = vld [vmem:[#allocation6 + $0x28] sm:$0xf]
    %v311 = vld [vmem:[#allocation6 + $0x2c] sm:$0xf]
    %v312 = vld [vmem:[#allocation6 + $0x30] sm:$0xf]
    %v313 = vld [vmem:[#allocation6 + $0x34] sm:$0xf]
    %v314 = vld [vmem:[#allocation6 + $0x38] sm:$0xf]
    %v315 = vld [vmem:[#allocation6 + $0x3c] sm:$0xf]
    %v316 = vld [vmem:[%s6] sm:$0x1]
    %v317 = vpack.c.bf16 %v299, %v298
    %v319 = vlaneseq
    %v320 = vshrl.u32 %v319, 7
    %v321 = vsub.s32 0, %v320
    %v322 = vrot.slane %v316, %v321
    %v340 = vunpack.c.l.b16 %v300
    %v341 = vunpack.c.l.b16 %v301
    %v342 = vunpack.c.l.b16 %v302
    %v343 = vunpack.c.l.b16 %v303
    %v344 = vunpack.c.l.b16 %v304
    %v345 = vunpack.c.l.b16 %v305
    %v346 = vunpack.c.l.b16 %v306
    %v347 = vunpack.c.l.b16 %v307
    %v348 = vunpack.c.l.b16 %v308
    %v349 = vunpack.c.l.b16 %v309
    %v350 = vunpack.c.l.b16 %v310
    %v351 = vunpack.c.l.b16 %v311
    %v352 = vunpack.c.l.b16 %v312
    %v353 = vunpack.c.l.b16 %v313
    %v354 = vunpack.c.l.b16 %v314
    %v355 = vunpack.c.l.b16 %v315
    %v356 = vpack.c.b16 %v341, %v340
    %v357 = vpack.c.b16 %v343, %v342
    %v358 = vpack.c.b16 %v345, %v344
    %v359 = vpack.c.b16 %v347, %v346
    %v360 = vpack.c.b16 %v349, %v348
    %v361 = vpack.c.b16 %v351, %v350
    %v362 = vpack.c.b16 %v353, %v352
    %v363 = vpack.c.b16 %v355, %v354
    %372 = vmatprep.subr.bf16.mxu0 0
    %373 = vmatpush1.bf16.msra.mxu0 %v356
    %374 = vmatprep.subr.bf16.mxu0 0
    %375 = vmatpush1.bf16.msra.mxu0 %v357
    %376 = vmatprep.subr.bf16.mxu0 0
    %377 = vmatpush1.bf16.msra.mxu0 %v358
    %378 = vmatprep.subr.bf16.mxu0 0
    %379 = vmatpush1.bf16.msra.mxu0 %v359
    %380 = vmatprep.subr.bf16.mxu0 0
    %381 = vmatpush1.bf16.msra.mxu0 %v360
    %382 = vmatprep.subr.bf16.mxu0 0
    %383 = vmatpush1.bf16.msra.mxu0 %v361
    %384 = vmatprep.subr.bf16.mxu0 0
    %385 = vmatpush1.bf16.msra.mxu0 %v362
    %386 = vmatprep.subr.bf16.mxu0 0
    %387 = vmatpush1.bf16.msra.mxu0 %v363
    %388 = vmatprep.subr.bf16.mxu0 0
    %389 = vmatpush1.bf16.msra.mxu0 0
    %390 = vmatprep.subr.bf16.mxu0 0
    %391 = vmatpush1.bf16.msra.mxu0 0
    %392 = vmatprep.subr.bf16.mxu0 0
    %393 = vmatpush1.bf16.msra.mxu0 0
    %394 = vmatprep.subr.bf16.mxu0 0
    %395 = vmatpush1.bf16.msra.mxu0 0
    %396 = vmatprep.subr.bf16.mxu0 0
    %397 = vmatpush1.bf16.msra.mxu0 0
    %398 = vmatprep.subr.bf16.mxu0 0
    %399 = vmatpush1.bf16.msra.mxu0 0
    %400 = vmatprep.subr.bf16.mxu0 0
    %401 = vmatpush1.bf16.msra.mxu0 0
    %402 = vmatprep.subr.bf16.mxu0 0
    %403 = vmatpush1.bf16.msra.mxu0 0
    %404 = vmatprep.mubr.bf16.mxu0 0
    %405 = vmatmul.mubr.bf16.gmra.mrb[0].mxu0 %v317
    %v406 = vpop.f32.mrb[0].mxu0
    %v407 = vadd.f32 %v322, %v406
    %v408 = vpop.f32.mrb[0].mxu0
    %v409 = vpop.f32.mrb[0].mxu0
    %v410 = vadd.f32 %v322, %v409
    %v411 = vpop.f32.mrb[0].mxu0
    %412 = vdwg.mxu0
    %413 = vst [vmem:[%s7] sm:$0xff] %v407
    %414 = vst [vmem:[%s7 + $0x8] sm:$0xff] %v410
    // Predicated region
    $region42: #{mlp_forward.1} parent=1 // pred_check
      _
    $region43: #{mlp_forward.1} parent=1 // pred_check_branch
      %416 = sbr.rel (0) target = $region45
    $region44: #{mlp_forward.1} parent=1 // pred_region
      _
    $region45: #{mlp_forward.1} parent=1 // pred_fallthru
      _
    // Predicated region
    $region46: #{mlp_forward.1} parent=1 // pred_check
      _
    $region47: #{mlp_forward.1} parent=1 // pred_check_branch
      %418 = sbr.rel (0) target = $region49
    $region48: #{mlp_forward.1} parent=1 // pred_region
      _
    $region49: #{mlp_forward.1} parent=1 // pred_fallthru
      _
    %419 = vsyncpa [#allocation3], 1
    %420 = vsyncpa [#allocation5], 1

</llo_original>
